<compile_context>
chip_gen: v7x
topology: tpu7x:2x2x1
jax: 0.10.0
libtpu: 0.0.40
codegen_flags: <defaults>
</compile_context>

<pallas_src>
import functools

import jax
import jax.numpy as jnp
from jax.experimental import pallas as pl
from jax.experimental.pallas import tpu as pltpu


def _distill_kl_kernel(ys_ref, yt_ref, out_ref, *, temperature, batch, tile_b, ragged):
    inv_t = 1.0 / float(temperature)
    ys = ys_ref[...].astype(jnp.float32) * inv_t
    yt = yt_ref[...].astype(jnp.float32) * inv_t

    # Student: only the stable log-sum-exp pieces (log_softmax folded away).
    ms = jnp.max(ys, axis=-1, keepdims=True)
    sum_es = jnp.sum(jnp.exp(ys - ms), axis=-1, keepdims=True)

    # Teacher: softmax reusing exp(yt - mt); approx EUP reciprocal only for the
    # full-tile scaling of p_t.
    mt = jnp.max(yt, axis=-1, keepdims=True)
    et = jnp.exp(yt - mt)
    sum_et = jnp.sum(et, axis=-1, keepdims=True)
    pt = et * pl.reciprocal(sum_et, approx=True)

    # log p_t - log p_s = (yt - ys) + (ms - mt) + log(sum_es / sum_et)
    # Single per-row log; exact (TB,1) divide keeps the row constant accurate.
    row_const = (ms - mt) + jnp.log(sum_es / sum_et)
    kl_row = jnp.sum(pt * ((yt - ys) + row_const), axis=-1, keepdims=True)  # (TB,1)

    pid = pl.program_id(0)
    if ragged:
        last = pl.num_programs(0) - 1

        @pl.when(pid != last)
        def _():
            out_ref[0, 0] = jnp.sum(kl_row)

        @pl.when(pid == last)
        def _():
            # Only the final tile pays for masking rows past the true batch.
            rows = jax.lax.broadcasted_iota(jnp.int32, kl_row.shape, 0) + pid * tile_b
            out_ref[0, 0] = jnp.sum(jnp.where(rows < batch, kl_row, 0.0))
    else:
        out_ref[0, 0] = jnp.sum(kl_row)


def _vmem_budgets():
    """Generation-aware (input_budget_bytes, vmem_limit_bytes)."""
    vmem_bytes = None
    try:
        vmem_bytes = getattr(pltpu.get_tpu_info(), "vmem_capacity_bytes", None)
    except Exception:
        vmem_bytes = None
    if vmem_bytes is not None and vmem_bytes >= 96 * 1024 * 1024:
        # v5e / v6e: 128 MiB physical VMEM — bigger tiles amortize grid overhead.
        return 24 * 1024 * 1024, 64 * 1024 * 1024
    # v7x (64 MiB physical) or unknown: leave headroom for ~6 tile-sized f32 temps.
    return 12 * 1024 * 1024, 48 * 1024 * 1024


def _choose_tile_b(batch, n_classes, itemsize, *, max_tile_rows, input_budget_bytes):
    """Return (tile_b rows, pipeline buffer count)."""
    # Native sublane packing: 8 rows (f32), 16 (bf16/f16), 32 (int8/fp8).
    pack = 8 * max(1, 4 // max(itemsize, 1))

    def tile_for(nbuf):
        per_row = 2 * nbuf * n_classes * itemsize  # 2 inputs x nbuf pipeline buffers
        tb = min(max_tile_rows, input_budget_bytes // max(per_row, 1))
        return max(pack, (tb // pack) * pack)

    tb = tile_for(2)
    if batch <= tb:
        return batch, 2  # single full-extent block (exempt from sublane rule)
    num_tiles = -(-batch // tb)
    if tb <= 64 and num_tiles >= 4:
        # Short compute vs. DMA of two (tile_b, C) slabs: go 3-deep and re-budget.
        return min(tb, tile_for(3)), 3
    return tb, 2


def _make_in_spec(tile_b, n_classes, buffer_count):
    index_map = lambda i: (i, 0)
    if buffer_count != 2:
        try:
            return pl.BlockSpec((tile_b, n_classes), index_map,
                                pipeline_mode=pl.Buffered(buffer_count))
        except (AttributeError, TypeError):
            pass  # older jax without pipeline_mode: fall back to default buffering
    return pl.BlockSpec((tile_b, n_classes), index_map)


def distill_kl(y_s, y_t, temperature, *, max_tile_rows=512):
    """DistillKL forward. y_s, y_t: (B, C) logits. Returns scalar float32 loss."""
    assert y_s.shape == y_t.shape and y_s.ndim == 2
    batch, n_classes = y_s.shape
    itemsize = jnp.dtype(y_s.dtype).itemsize

    input_budget, vmem_limit = _vmem_budgets()
    tile_b, buffer_count = _choose_tile_b(
        batch, n_classes, itemsize,
        max_tile_rows=max_tile_rows, input_budget_bytes=input_budget)
    num_tiles = pl.cdiv(batch, tile_b)
    ragged = (batch % tile_b) != 0

    kernel = functools.partial(
        _distill_kl_kernel,
        temperature=float(temperature), batch=batch, tile_b=tile_b, ragged=ragged)

    partials = pl.pallas_call(
        kernel,
        out_shape=jax.ShapeDtypeStruct((num_tiles, 1), jnp.float32),
        grid=(num_tiles,),
        in_specs=[_make_in_spec(tile_b, n_classes, buffer_count),
                  _make_in_spec(tile_b, n_classes, buffer_count)],
        out_specs=pl.BlockSpec((1, 1), lambda i: (i, 0),
                               memory_space=pltpu.MemorySpace.SMEM),
        compiler_params=pltpu.CompilerParams(
            dimension_semantics=("parallel",),  # independent tiles -> both TCs on v7x
            vmem_limit_bytes=vmem_limit,
        ),
    )(y_s, y_t)

    t = float(temperature)
    # Tiny (num_tiles,) reduction + T^2/B scaling stays in the JAX wrapper.
    return jnp.sum(partials) * (t * t / float(batch))


def _reference(y_s, y_t, temperature):
    t = float(temperature)
    log_ps = jax.nn.log_softmax(y_s.astype(jnp.float32) / t, axis=1)
    pt = jax.nn.softmax(y_t.astype(jnp.float32) / t, axis=1)
    kl = jnp.sum(pt * (jnp.log(pt) - log_ps))
    return kl * t * t / y_s.shape[0]


if __name__ == "__main__":
    T = 4.0
    key = jax.random.PRNGKey(0)
    k1, k2, k3, k4, k5, k6 = jax.random.split(key, 6)

    # Case 1: lane-aligned class axis, single full-batch tile.
    y_s1 = jax.random.normal(k1, (8, 128), dtype=jnp.float32)
    y_t1 = jax.random.normal(k2, (8, 128), dtype=jnp.float32)
    loss1 = jax.block_until_ready(distill_kl(y_s1, y_t1, T))
    ref1 = jax.block_until_ready(_reference(y_s1, y_t1, T))
    assert jnp.allclose(loss1, ref1, rtol=1e-3, atol=1e-4), (loss1, ref1)

    # Case 2: multi-tile parallel grid, ragged (masked) last tile, non-128 C.
    y_s2 = jax.random.normal(k3, (20, 96), dtype=jnp.float32)
    y_t2 = jax.random.normal(k4, (20, 96), dtype=jnp.float32)
    loss2 = jax.block_until_ready(distill_kl(y_s2, y_t2, T, max_tile_rows=8))
    ref2 = jax.block_until_ready(_reference(y_s2, y_t2, T))
    assert jnp.allclose(loss2, ref2, rtol=1e-3, atol=1e-4), (loss2, ref2)

    # Case 3: bf16 logits, small tiles, >= 4 tiles -> deep-pipeline (Buffered(3))
    # path plus dtype-aware (16-row) sublane rounding.
    y_s3 = jax.random.normal(k5, (64, 128), dtype=jnp.bfloat16)
    y_t3 = jax.random.normal(k6, (64, 128), dtype=jnp.bfloat16)
    loss3 = jax.block_until_ready(distill_kl(y_s3, y_t3, T, max_tile_rows=8))
    ref3 = jax.block_until_ready(_reference(y_s3, y_t3, T))
    assert jnp.allclose(loss3, ref3, rtol=1e-3, atol=1e-4), (loss3, ref3)

    print("KERNEL_OK")
</pallas_src>

<mosaic_0001>
module attributes {stable_mosaic.version = 11 : i64} {
  func.func @_distill_kl_kernel(%arg0: i32, %arg1: memref<8x128xf32, #tpu.memory_space<vmem>>, %arg2: memref<8x128xf32, #tpu.memory_space<vmem>>, %arg3: memref<1x1xf32, #tpu.memory_space<smem>>) attributes {dimension_semantics = [#tpu.dimension_semantics<parallel>], iteration_bounds = array<i64: 1>, scalar_prefetch = 0 : i64, scratch_operands = 0 : i64, tpu.core_type = #tpu.core_type<tc>, window_params = [{transform_indices = @transform_0, window_bounds = array<i64: 8, 128>}, {transform_indices = @transform_1, window_bounds = array<i64: 8, 128>}, {transform_indices = @transform_2, window_bounds = array<i64: 1, 1>}]} {
    %c0 = arith.constant 0 : index
    %c0_0 = arith.constant 0 : index
    %0 = vector.load %arg1[%c0, %c0_0] : memref<8x128xf32, #tpu.memory_space<vmem>>, vector<8x128xf32>
    %cst = arith.constant 2.500000e-01 : f32
    %1 = vector.broadcast %cst : f32 to vector<8x128xf32>
    %2 = arith.mulf %0, %1 : vector<8x128xf32>
    %c0_1 = arith.constant 0 : index
    %c0_2 = arith.constant 0 : index
    %3 = vector.load %arg2[%c0_1, %c0_2] : memref<8x128xf32, #tpu.memory_space<vmem>>, vector<8x128xf32>
    %cst_3 = arith.constant 2.500000e-01 : f32
    %4 = vector.broadcast %cst_3 : f32 to vector<8x128xf32>
    %5 = arith.mulf %3, %4 : vector<8x128xf32>
    %cst_4 = arith.constant dense<0xFF800000> : vector<8xf32>
    %6 = vector.multi_reduction <maximumf>, %2, %cst_4 [1] : vector<8x128xf32> to vector<8xf32>
    %7 = vector.shape_cast %6 : vector<8xf32> to vector<8x1xf32>
    %8 = vector.broadcast %7 : vector<8x1xf32> to vector<8x128xf32>
    %9 = arith.subf %2, %8 : vector<8x128xf32>
    %10 = math.exp %9 : vector<8x128xf32>
    %cst_5 = arith.constant dense<0.000000e+00> : vector<8xf32>
    %11 = vector.multi_reduction <add>, %10, %cst_5 [1] : vector<8x128xf32> to vector<8xf32>
    %12 = vector.shape_cast %11 : vector<8xf32> to vector<8x1xf32>
    %cst_6 = arith.constant dense<0xFF800000> : vector<8xf32>
    %13 = vector.multi_reduction <maximumf>, %5, %cst_6 [1] : vector<8x128xf32> to vector<8xf32>
    %14 = vector.shape_cast %13 : vector<8xf32> to vector<8x1xf32>
    %15 = vector.broadcast %14 : vector<8x1xf32> to vector<8x128xf32>
    %16 = arith.subf %5, %15 : vector<8x128xf32>
    %17 = math.exp %16 : vector<8x128xf32>
    %cst_7 = arith.constant dense<0.000000e+00> : vector<8xf32>
    %18 = vector.multi_reduction <add>, %17, %cst_7 [1] : vector<8x128xf32> to vector<8xf32>
    %19 = vector.shape_cast %18 : vector<8xf32> to vector<8x1xf32>
    %20 = tpu.reciprocal %19 {approx = true} : vector<8x1xf32> -> vector<8x1xf32>
    %21 = vector.broadcast %20 : vector<8x1xf32> to vector<8x128xf32>
    %22 = arith.mulf %17, %21 : vector<8x128xf32>
    %23 = arith.subf %7, %14 : vector<8x1xf32>
    %24 = arith.divf %12, %19 : vector<8x1xf32>
    %25 = math.log %24 : vector<8x1xf32>
    %26 = arith.addf %23, %25 : vector<8x1xf32>
    %27 = arith.subf %5, %2 : vector<8x128xf32>
    %28 = vector.broadcast %26 : vector<8x1xf32> to vector<8x128xf32>
    %29 = arith.addf %27, %28 : vector<8x128xf32>
    %30 = arith.mulf %22, %29 : vector<8x128xf32>
    %cst_8 = arith.constant dense<0.000000e+00> : vector<8xf32>
    %31 = vector.multi_reduction <add>, %30, %cst_8 [1] : vector<8x128xf32> to vector<8xf32>
    %32 = vector.shape_cast %31 : vector<8xf32> to vector<8x1xf32>
    %33 = vector.shape_cast %32 : vector<8x1xf32> to vector<1x8x1xf32>
    %cst_9 = arith.constant dense<0.000000e+00> : vector<1xf32>
    %34 = vector.multi_reduction <add>, %33, %cst_9 [1, 2] : vector<1x8x1xf32> to vector<1xf32>
    %35 = vector.shape_cast %34 : vector<1xf32> to vector<1x1x1xf32>
    %36 = vector.extract %35[0, 0, 0] : f32 from vector<1x1x1xf32>
    %c0_10 = arith.constant 0 : index
    %c0_11 = arith.constant 0 : index
    %37 = memref.load %arg3[%c0_10, %c0_11] : memref<1x1xf32, #tpu.memory_space<smem>>
    memref.store %36, %arg3[%c0_10, %c0_11] : memref<1x1xf32, #tpu.memory_space<smem>>
    return
  }
  func.func @transform_0(%arg0: i32) -> (i32, i32) {
    %c0_i32 = arith.constant 0 : i32
    %c0_i32_0 = arith.constant 0 : i32
    return %arg0, %c0_i32 : i32, i32
  }
  func.func @transform_1(%arg0: i32) -> (i32, i32) {
    %c0_i32 = arith.constant 0 : i32
    %c0_i32_0 = arith.constant 0 : i32
    return %arg0, %c0_i32 : i32, i32
  }
  func.func @transform_2(%arg0: i32) -> (i32, i32) {
    %c0_i32 = arith.constant 0 : i32
    %c0_i32_0 = arith.constant 0 : i32
    return %arg0, %c0_i32 : i32, i32
  }
}

</mosaic_0001>

<llo_original>
// kernel: tpu_custom_call.1
$region0: #{tpu_custom_call.1}
  #allocation0 [shape = 'u32[]', space=smem, size = 0x4, offset = 0x4, fixed_abs, tag = 'smem constant byte address 0x4 - core index']
  #allocation1 [shape = 'u32[144,128]{1,0:T(1,128)}', space=vmem, size = 0x12000, scoped, tag = 'internal scratch']
  %s0 = inlined_call_operand.hbm [shape: f32[8,128], index: 0, kind: input, shape index: {}]
  %s1 = inlined_call_operand.hbm [shape: f32[8,128], index: 1, kind: input, shape index: {}]
  %s2 = inlined_call_operand.hbm [shape: f32[1,1], index: 2, kind: output, shape index: {}]
  %s3 = sld [smem:[#allocation0]]
  $region26: #{tpu_custom_call.1} parent=0
    _
  %s5 = ssub.s32 1, %s3
  %s6 = scalar_select 0, %s5, %s3
  $region1: #{tpu_custom_call.1} parent=0
    #allocation2 [shape = 'u8[4096]{0}', space=vmem, size = 0x1000, scoped, tag = 'input window, operand 0, single buffered']
    #allocation3 [shape = 's32[1]{0}', space=sflag, size = 0x4, scoped, tag = 'scoped memory for tpu_custom_call.1']
    #allocation4 [shape = 's32[1]{0}', space=sflag, size = 0x4, scoped, tag = 'scoped memory for tpu_custom_call.1']
    #allocation5 [shape = 'u8[4096]{0}', space=vmem, size = 0x1000, scoped, tag = 'input window, operand 1, single buffered']
    #allocation6 [shape = 's32[1]{0}', space=sflag, size = 0x4, scoped, tag = 'scoped memory for tpu_custom_call.1']
    #allocation7 [shape = 'u8[512]{0}', space=smem, size = 0x200, scoped, tag = 'output window, operand 0, single buffered']
    %7 = vsyncpa [#allocation3], 0
    %8 = vsyncpa [#allocation6], 0
    %9 = vsyncpa [#allocation4], 0
    // Predicated region
    $region2: #{tpu_custom_call.1} parent=1 // pred_check
      _
    $region3: #{tpu_custom_call.1} parent=1 // pred_check_branch
      %11 = sbr.rel (0) target = $region5
    $region4: #{tpu_custom_call.1} parent=1 // pred_region
      %s13 = ssub.s32 128, 128
      %14 = vsyncadd [#allocation3], %s13
      %s16 = sshll.u32 [#allocation2], 4
      %s17 = int_to_ptr.vmem [resolvable:$true] %s16
      %19 = dma.hbm_to_vmem [thread:$0]  %s0, 128, %s17, [#allocation3]
    $region5: #{tpu_custom_call.1} parent=1 // pred_fallthru
      _
    // Predicated region
    $region6: #{tpu_custom_call.1} parent=1 // pred_check
      _
    $region7: #{tpu_custom_call.1} parent=1 // pred_check_branch
      %21 = sbr.rel (0) target = $region9
    $region8: #{tpu_custom_call.1} parent=1 // pred_region
      %s23 = ssub.s32 128, 128
      %24 = vsyncadd [#allocation6], %s23
      %s26 = sshll.u32 [#allocation5], 4
      %s27 = int_to_ptr.vmem [resolvable:$true] %s26
      %29 = dma.hbm_to_vmem [thread:$0]  %s1, 128, %s27, [#allocation6]
    $region9: #{tpu_custom_call.1} parent=1 // pred_fallthru
      _
    // Predicated region
    $region10: #{tpu_custom_call.1} parent=1 // pred_check
      _
    $region11: #{tpu_custom_call.1} parent=1 // pred_check_branch
      %31 = sbr.rel (0) target = $region13
    $region12: #{tpu_custom_call.1} parent=1 // pred_region
      %32 = dma.done [#allocation3], 128
    $region13: #{tpu_custom_call.1} parent=1 // pred_fallthru
      _
    // Predicated region
    $region14: #{tpu_custom_call.1} parent=1 // pred_check
      _
    $region15: #{tpu_custom_call.1} parent=1 // pred_check_branch
      %34 = sbr.rel (0) target = $region17
    $region16: #{tpu_custom_call.1} parent=1 // pred_region
      %35 = dma.done [#allocation6], 128
    $region17: #{tpu_custom_call.1} parent=1 // pred_fallthru
      _
    %v36 = vld [vmem:[#allocation2] sm:$0xff]
    %v37 = vmul.f32 %v36, 0.25
    %v38 = vld [vmem:[#allocation5] sm:$0xff]
    %v39 = vmul.f32 %v38, 0.25
    %40 = vmax.xlane.f32.xlu0 %v37
    %v41 = vpop.xlane.xlu0 %40
    %v42 = vsub.f32 %v37, %v41
    %v43 = vmul.f32 %v42, 1.442695
    %v44 = vpow.pop %v43
    %45 = vadd.xlane.f32.xlu0 %v44
    %v46 = vpop.xlane.xlu0 %45
    %47 = vmax.xlane.f32.xlu0 %v39
    %v48 = vpop.xlane.xlu0 %47
    %v49 = vsub.f32 %v39, %v48
    %v50 = vmul.f32 %v49, 1.442695
    %v51 = vpow.pop %v50
    %52 = vadd.xlane.f32.xlu0 %v51
    %v53 = vpop.xlane.xlu0 %52
    %v54 = vrcp.pop %v53
    %v55 = vmul.f32 %v51, %v54
    %v56 = vsub.f32 %v41, %v48
    %v57 = vrcp.pop %v53
    %v58 = vmul.f32 %v46, %v57
    %v59 = vlog2.pop %v58
    %v60 = vmul.f32 %v59, 0.6931472
    %v61 = vadd.f32 %v56, %v60
    %v62 = vsub.f32 %v39, %v37
    %v63 = vadd.f32 %v62, %v61
    %v64 = vmul.f32 %v55, %v63
    %65 = vadd.xlane.f32.xlu0 %v64
    %v66 = vpop.xlane.xlu0 %65
    %vm67 = vcmask 7168
    %v68 = vsel %vm67, %v66, 0.0
    %69 = vadd.xlane.f32.xlu0 %v68
    %v70 = vpop.xlane.xlu0 %69
    %v71 = vrot.slane %v70, 4
    %v72 = vadd.f32 %v70, %v71
    %v73 = vrot.slane %v72, 2
    %v74 = vadd.f32 %v72, %v73
    %v75 = vrot.slane %v74, 1
    %v76 = vadd.f32 %v74, %v75
    %s77 = vtos %v76
    %s78 = scalar_lea.smem [#allocation7], 0
    %79 = sst [smem:[%s78]] %s77
    // Predicated region
    $region18: #{tpu_custom_call.1} parent=1 // pred_check
      _
    $region19: #{tpu_custom_call.1} parent=1 // pred_check_branch
      %81 = sbr.rel (0) target = $region21
    $region20: #{tpu_custom_call.1} parent=1 // pred_region
      %s83 = ssub.s32 16, 16
      %84 = vsyncadd [#allocation4], %s83
      %87 = dma.smem_to_hbm [#allocation7], 16, %s2, [#allocation4]
    $region21: #{tpu_custom_call.1} parent=1 // pred_fallthru
      _
    // Predicated region
    $region22: #{tpu_custom_call.1} parent=1 // pred_check
      _
    $region23: #{tpu_custom_call.1} parent=1 // pred_check_branch
      %89 = sbr.rel (0) target = $region25
    $region24: #{tpu_custom_call.1} parent=1 // pred_region
      %90 = dma.done [#allocation4], 16
    $region25: #{tpu_custom_call.1} parent=1 // pred_fallthru
      _
    %91 = sfence
    %92 = vsyncpa [#allocation3], 1
    %93 = vsyncpa [#allocation6], 1
    %94 = vsyncpa [#allocation4], 1

</llo_original>
